<compile_context>
chip_gen: v7x
topology: tpu7x:2x2x1
jax: 0.10.0
libtpu: 0.0.40
codegen_flags: <defaults>
</compile_context>

<pallas_src>
import functools

import jax
import jax.numpy as jnp
from jax.experimental import pallas as pl
from jax.experimental.pallas import tpu as pltpu


def _round_up(n, m):
    return ((n + m - 1) // m) * m


def _qnetwork_kernel(xa_ref, w1_ref, w2_ref, misc_ref, b3_ref, out_ref):
    """One batch tile: fc1/ReLU + fc2/ReLU + fc3 on a pre-concatenated [x, a] tile."""
    misc = misc_ref[...]            # (3, hidden) f32: rows = b1, b2, w3-row
    b1 = misc[0:1, :]
    b2 = misc[1:2, :]
    w3 = misc[2:3, :]

    # fc1: single fused MXU pass (bf16 operands, f32 accumulation).
    h1 = jnp.dot(xa_ref[...], w1_ref[...], preferred_element_type=jnp.float32)
    h1 = jnp.maximum(h1 + b1, 0.0)                      # bias + ReLU in f32

    # fc2 + ReLU.
    h2 = jnp.dot(h1.astype(jnp.bfloat16), w2_ref[...],
                 preferred_element_type=jnp.float32)
    h2 = jnp.maximum(h2 + b2, 0.0)

    # fc3 (N=1): VPU multiply + lane reduction (keeps the MXU free for fc1/fc2).
    q = jnp.sum(h2 * w3, axis=1, keepdims=True) + b3_ref[0, 0]
    out_ref[...] = q.astype(out_ref.dtype)


@functools.partial(jax.jit, static_argnames=("block_b",))
def qnetwork_forward(x, a, params, *, block_b=1024):
    """Pallas forward of the DDPG critic.  x: (B, obs_dim), a: (B, act_dim) -> (B, 1)."""
    w1, b1, w2, b2, w3, b3 = params
    B, obs_dim = x.shape
    act_dim = a.shape[1]
    in_dim = obs_dim + act_dim
    hidden = w1.shape[1]

    # Wrapper-side prep (runs once under jit, fused by XLA):
    #  * concat [x, a] and cast to bf16 -> one MXU pass for fc1, half the HBM
    #    bytes streamed per row,
    #  * matmul weights to bf16 (f32 accumulate on the MXU),
    #  * pack b1 / b2 / fc3-weight-row into one (3, hidden) f32 tile.
    xa = jnp.concatenate([x, a], axis=1).astype(jnp.bfloat16)
    w1b = w1.astype(jnp.bfloat16)
    w2b = w2.astype(jnp.bfloat16)
    misc = jnp.concatenate(
        [b1.reshape(1, hidden), b2.reshape(1, hidden), w3.reshape(1, hidden)],
        axis=0).astype(jnp.float32)
    b3s = b3.reshape(1, 1).astype(jnp.float32)

    # Batch tiling: multiples of 8 rows (f32 sublanes).  Force >= 2 tiles for
    # any non-trivial batch so v7x's second TensorCore gets work; cap tiles at
    # block_b rows so per-step overhead is amortized at large B.
    n_tiles = max(1, pl.cdiv(B, block_b))
    if n_tiles == 1 and B > 8:
        n_tiles = 2
    bb = _round_up(pl.cdiv(B, n_tiles), 8)
    B_pad = _round_up(B, bb)
    grid_b = B_pad // bb
    if B_pad != B:
        xa = jnp.pad(xa, ((0, B_pad - B), (0, 0)))

    const = lambda i: (0, 0)  # weights/biases: same block every step -> VMEM-resident
    out = pl.pallas_call(
        _qnetwork_kernel,
        out_shape=jax.ShapeDtypeStruct((B_pad, 1), jnp.float32),
        grid=(grid_b,),
        in_specs=[
            pl.BlockSpec((bb, in_dim), lambda i: (i, 0)),       # [x|a] tile (bf16, streamed)
            pl.BlockSpec((in_dim, hidden), const),              # W1 (bf16)
            pl.BlockSpec((hidden, hidden), const),              # W2 (bf16)
            pl.BlockSpec((3, hidden), const),                   # [b1; b2; w3row] (f32)
            pl.BlockSpec(memory_space=pltpu.MemorySpace.SMEM),  # b3 scalar
        ],
        out_specs=pl.BlockSpec((bb, 1), lambda i: (i, 0)),
        compiler_params=pltpu.CompilerParams(
            # v7x: shard batch tiles across both TensorCores; harmless on v5e/v6e.
            dimension_semantics=("parallel",),
        ),
    )(xa, w1b, w2b, misc, b3s)

    return out[:B]


def init_params(key, obs_dim, act_dim, hidden=256):
    """Deterministic synthetic init (PyTorch-Linear-like uniform fan-in bounds)."""
    in_dim = obs_dim + act_dim
    ks = jax.random.split(key, 6)

    def lin(kw, kb, fan_in, fan_out):
        bound = 1.0 / jnp.sqrt(jnp.float32(fan_in))
        w = jax.random.uniform(kw, (fan_in, fan_out), jnp.float32, -bound, bound)
        b = jax.random.uniform(kb, (1, fan_out), jnp.float32, -bound, bound)
        return w, b

    w1, b1 = lin(ks[0], ks[1], in_dim, hidden)
    w2, b2 = lin(ks[2], ks[3], hidden, hidden)
    w3, b3 = lin(ks[4], ks[5], hidden, 1)
    return (w1, b1, w2, b2, w3, b3)


def _reference_f32(x, a, params):
    """Exact f32 reference (mirrors the PyTorch module)."""
    w1, b1, w2, b2, w3, b3 = params
    h = jnp.concatenate([x, a], axis=1)
    h = jnp.maximum(h @ w1 + b1, 0.0)
    h = jnp.maximum(h @ w2 + b2, 0.0)
    return h @ w3 + b3


def _reference_bf16(x, a, params):
    """Reference matching the kernel's bf16-operand / f32-accumulate matmuls."""
    w1, b1, w2, b2, w3, b3 = params
    h = jnp.concatenate([x, a], axis=1).astype(jnp.bfloat16)
    h = jnp.dot(h, w1.astype(jnp.bfloat16), preferred_element_type=jnp.float32)
    h = jnp.maximum(h + b1, 0.0)
    h = jnp.dot(h.astype(jnp.bfloat16), w2.astype(jnp.bfloat16),
                preferred_element_type=jnp.float32)
    h = jnp.maximum(h + b2, 0.0)
    return h @ w3 + b3


def _check(B, obs_dim, act_dim, key):
    k_x, k_a, k_p = jax.random.split(key, 3)
    x = jax.random.normal(k_x, (B, obs_dim), jnp.float32)
    a = jax.random.normal(k_a, (B, act_dim), jnp.float32)
    params = init_params(k_p, obs_dim, act_dim, hidden=256)

    out = jax.block_until_ready(qnetwork_forward(x, a, params))
    assert out.shape == (B, 1), out.shape

    # Tight check vs a reference that mirrors the kernel's bf16/f32 matmuls.
    ref_bf16 = _reference_bf16(x, a, params)
    assert jnp.allclose(out, ref_bf16, atol=2e-3, rtol=2e-3), \
        f"mismatch vs bf16-matched reference: {jnp.max(jnp.abs(out - ref_bf16))}"

    # Loose check vs the exact f32 PyTorch-equivalent math (bf16 matmul noise).
    ref_f32 = _reference_f32(x, a, params)
    assert jnp.max(jnp.abs(out - ref_f32)) < 1e-1, \
        f"mismatch vs f32 reference: {jnp.max(jnp.abs(out - ref_f32))}"


if __name__ == "__main__":
    key = jax.random.PRNGKey(0)
    k1, k2 = jax.random.split(key)

    # Small single-tile case (grid = 1).
    _check(B=8, obs_dim=16, act_dim=4, key=k1)
    # Multi-tile case with padding (grid = 2) to exercise the pipelined path.
    _check(B=40, obs_dim=16, act_dim=4, key=k2)

    print("KERNEL_OK")
</pallas_src>

<mosaic_0001>
module attributes {stable_mosaic.version = 11 : i64} {
  func.func @_qnetwork_kernel(%arg0: i32, %arg1: memref<8x20xbf16, #tpu.memory_space<vmem>>, %arg2: memref<20x256xbf16, #tpu.memory_space<vmem>>, %arg3: memref<256x256xbf16, #tpu.memory_space<vmem>>, %arg4: memref<3x256xf32, #tpu.memory_space<vmem>>, %arg5: memref<1x1xf32, #tpu.memory_space<smem>>, %arg6: memref<8x1xf32, #tpu.memory_space<vmem>>) attributes {dimension_semantics = [#tpu.dimension_semantics<parallel>], iteration_bounds = array<i64: 1>, scalar_prefetch = 0 : i64, scratch_operands = 0 : i64, tpu.core_type = #tpu.core_type<tc>, window_params = [{transform_indices = @transform_0, window_bounds = array<i64: 8, 20>}, {pipeline_mode = #tpu.pipeline_mode<synchronous>, transform_indices = @transform_1, window_bounds = array<i64: 20, 256>}, {pipeline_mode = #tpu.pipeline_mode<synchronous>, transform_indices = @transform_2, window_bounds = array<i64: 256, 256>}, {pipeline_mode = #tpu.pipeline_mode<synchronous>, transform_indices = @transform_3, window_bounds = array<i64: 3, 256>}, {transform_indices = @transform_4, window_bounds = array<i64: 1, 1>}, {transform_indices = @transform_5, window_bounds = array<i64: 8, 1>}]} {
    %c0 = arith.constant 0 : index
    %c0_0 = arith.constant 0 : index
    %0 = vector.load %arg4[%c0, %c0_0] : memref<3x256xf32, #tpu.memory_space<vmem>>, vector<3x256xf32>
    %1 = vector.extract_strided_slice %0 {offsets = [0, 0], sizes = [1, 256], strides = [1, 1]} : vector<3x256xf32> to vector<1x256xf32>
    %2 = vector.extract_strided_slice %0 {offsets = [1, 0], sizes = [1, 256], strides = [1, 1]} : vector<3x256xf32> to vector<1x256xf32>
    %3 = vector.extract_strided_slice %0 {offsets = [2, 0], sizes = [1, 256], strides = [1, 1]} : vector<3x256xf32> to vector<1x256xf32>
    %c0_1 = arith.constant 0 : index
    %c0_2 = arith.constant 0 : index
    %4 = vector.load %arg1[%c0_1, %c0_2] : memref<8x20xbf16, #tpu.memory_space<vmem>>, vector<8x20xbf16>
    %c0_3 = arith.constant 0 : index
    %c0_4 = arith.constant 0 : index
    %5 = vector.load %arg2[%c0_3, %c0_4] : memref<20x256xbf16, #tpu.memory_space<vmem>>, vector<20x256xbf16>
    %cst = arith.constant dense<0.000000e+00> : vector<8x256xf32>
    %6 = tpu.matmul %4, %5, %cst {dimension_numbers = #tpu.dot_dimension_numbers<[1], [0], [0], [1], [0, 0, 1, 1], [], []>} : vector<8x20xbf16>, vector<20x256xbf16>, vector<8x256xf32> -> vector<8x256xf32>
    %7 = vector.broadcast %1 : vector<1x256xf32> to vector<8x256xf32>
    %8 = arith.addf %6, %7 : vector<8x256xf32>
    %cst_5 = arith.constant 0.000000e+00 : f32
    %9 = vector.broadcast %cst_5 : f32 to vector<8x256xf32>
    %10 = arith.maximumf %8, %9 : vector<8x256xf32>
    %11 = arith.truncf %10 : vector<8x256xf32> to vector<8x256xbf16>
    %c0_6 = arith.constant 0 : index
    %c0_7 = arith.constant 0 : index
    %12 = vector.load %arg3[%c0_6, %c0_7] : memref<256x256xbf16, #tpu.memory_space<vmem>>, vector<256x256xbf16>
    %cst_8 = arith.constant dense<0.000000e+00> : vector<8x256xf32>
    %13 = tpu.matmul %11, %12, %cst_8 {dimension_numbers = #tpu.dot_dimension_numbers<[1], [0], [0], [1], [0, 0, 1, 1], [], []>} : vector<8x256xbf16>, vector<256x256xbf16>, vector<8x256xf32> -> vector<8x256xf32>
    %14 = vector.broadcast %2 : vector<1x256xf32> to vector<8x256xf32>
    %15 = arith.addf %13, %14 : vector<8x256xf32>
    %cst_9 = arith.constant 0.000000e+00 : f32
    %16 = vector.broadcast %cst_9 : f32 to vector<8x256xf32>
    %17 = arith.maximumf %15, %16 : vector<8x256xf32>
    %18 = vector.broadcast %3 : vector<1x256xf32> to vector<8x256xf32>
    %19 = arith.mulf %17, %18 : vector<8x256xf32>
    %cst_10 = arith.constant dense<0.000000e+00> : vector<8xf32>
    %20 = vector.multi_reduction <add>, %19, %cst_10 [1] : vector<8x256xf32> to vector<8xf32>
    %21 = vector.shape_cast %20 : vector<8xf32> to vector<8x1xf32>
    %c0_11 = arith.constant 0 : index
    %c0_12 = arith.constant 0 : index
    %22 = memref.load %arg5[%c0_11, %c0_12] : memref<1x1xf32, #tpu.memory_space<smem>>
    %23 = vector.broadcast %22 : f32 to vector<8x1xf32>
    %24 = arith.addf %21, %23 : vector<8x1xf32>
    %c0_13 = arith.constant 0 : index
    %c0_14 = arith.constant 0 : index
    %25 = vector.load %arg6[%c0_13, %c0_14] : memref<8x1xf32, #tpu.memory_space<vmem>>, vector<8x1xf32>
    tpu.vector_store %arg6[%c0_13, %c0_14], %24 {strides = array<i32>} : memref<8x1xf32, #tpu.memory_space<vmem>>, vector<8x1xf32>,
    return
  }
  func.func @transform_0(%arg0: i32) -> (i32, i32) {
    %c0_i32 = arith.constant 0 : i32
    %c0_i32_0 = arith.constant 0 : i32
    return %arg0, %c0_i32 : i32, i32
  }
  func.func @transform_1(%arg0: i32) -> (i32, i32) {
    %c0_i32 = arith.constant 0 : i32
    %c0_i32_0 = arith.constant 0 : i32
    %c0_i32_1 = arith.constant 0 : i32
    return %c0_i32, %c0_i32_0 : i32, i32
  }
  func.func @transform_2(%arg0: i32) -> (i32, i32) {
    %c0_i32 = arith.constant 0 : i32
    %c0_i32_0 = arith.constant 0 : i32
    %c0_i32_1 = arith.constant 0 : i32
    return %c0_i32, %c0_i32_0 : i32, i32
  }
  func.func @transform_3(%arg0: i32) -> (i32, i32) {
    %c0_i32 = arith.constant 0 : i32
    %c0_i32_0 = arith.constant 0 : i32
    %c0_i32_1 = arith.constant 0 : i32
    return %c0_i32, %c0_i32_0 : i32, i32
  }
  func.func @transform_4(%arg0: i32) -> (i32, i32) {
    %c0_i32 = arith.constant 0 : i32
    %c0_i32_0 = arith.constant 0 : i32
    %c0_i32_1 = arith.constant 0 : i32
    return %c0_i32, %c0_i32_0 : i32, i32
  }
  func.func @transform_5(%arg0: i32) -> (i32, i32) {
    %c0_i32 = arith.constant 0 : i32
    %c0_i32_0 = arith.constant 0 : i32
    return %arg0, %c0_i32 : i32, i32
  }
}

</mosaic_0001>

<llo_original>
// kernel: qnetwork_forward.1
$region0: #{qnetwork_forward.1}
  #allocation0 [shape = 'u32[]', space=smem, size = 0x4, offset = 0x4, fixed_abs, tag = 'smem constant byte address 0x4 - core index']
  #allocation1 [shape = 'u32[144,128]{1,0:T(1,128)}', space=vmem, size = 0x12000, scoped, tag = 'internal scratch']
  #allocation2 [shape = 'f32[1,1]{1,0:T(1,128)S(6)}', space=smem, size = 0x200, scoped, tag = 'scoped memory for qnetwork_forward.1']
  %s0 = inlined_call_operand.vmem [shape: bf16[8,20], index: 0, kind: input, shape index: {}]
  %s1 = inlined_call_operand.vmem [shape: bf16[20,256], index: 1, kind: input, shape index: {}]
  %s2 = inlined_call_operand.vmem [shape: bf16[256,256], index: 2, kind: input, shape index: {}]
  %s3 = inlined_call_operand.vmem [shape: f32[3,256], index: 3, kind: input, shape index: {}]
  %s4 = inlined_call_operand.<no memory space> [shape: f32[1,1], index: 4, kind: input, shape index: {}]
  %s5 = inlined_call_operand.vmem [shape: f32[8,1], index: 5, kind: output, shape index: {}]
  %s6 = sld [smem:[#allocation0]]
  $region30: #{qnetwork_forward.1} parent=0
    _
  %s8 = ssub.s32 1, %s6
  %s9 = scalar_select 0, %s8, %s6
  %10 = sst [smem:[#allocation2]] %s4
  // Predicated region
  $region2: #{qnetwork_forward.1} parent=0 // pred_check
    _
  $region3: #{qnetwork_forward.1} parent=0 // pred_check_branch
    %12 = sbr.rel (0) target = $region5
  $region4: #{qnetwork_forward.1} parent=0 // pred_region
    _
  $region5: #{qnetwork_forward.1} parent=0 // pred_fallthru
    _
  // Predicated region
  $region6: #{qnetwork_forward.1} parent=0 // pred_check
    _
  $region7: #{qnetwork_forward.1} parent=0 // pred_check_branch
    %14 = sbr.rel (0) target = $region9
  $region8: #{qnetwork_forward.1} parent=0 // pred_region
    _
  $region9: #{qnetwork_forward.1} parent=0 // pred_fallthru
    _
  // Predicated region
  $region10: #{qnetwork_forward.1} parent=0 // pred_check
    _
  $region11: #{qnetwork_forward.1} parent=0 // pred_check_branch
    %16 = sbr.rel (0) target = $region13
  $region12: #{qnetwork_forward.1} parent=0 // pred_region
    _
  $region13: #{qnetwork_forward.1} parent=0 // pred_fallthru
    _
  // Predicated region
  $region14: #{qnetwork_forward.1} parent=0 // pred_check
    _
  $region15: #{qnetwork_forward.1} parent=0 // pred_check_branch
    %18 = sbr.rel (0) target = $region17
  $region16: #{qnetwork_forward.1} parent=0 // pred_region
    _
  $region17: #{qnetwork_forward.1} parent=0 // pred_fallthru
    _
  // Predicated region
  $region18: #{qnetwork_forward.1} parent=0 // pred_check
    _
  $region19: #{qnetwork_forward.1} parent=0 // pred_check_branch
    %20 = sbr.rel (0) target = $region21
  $region20: #{qnetwork_forward.1} parent=0 // pred_region
    _
  $region21: #{qnetwork_forward.1} parent=0 // pred_fallthru
    _
  %v22 = vld [vmem:[%s3] sm:$0x77]
  %v23 = vld [vmem:[%s0] sm:$0xf]
  %v24 = vld [vmem:[%s1] sm:$0xff]
  %v25 = vld [vmem:[%s1 + $0x8] sm:$0xff]
  %v26 = vld [vmem:[%s1 + $0x10] sm:$0x33]
  %v28 = vlaneseq
  %v29 = vshrl.u32 %v28, 7
  %v30 = vsub.s32 0, %v29
  %v31 = vrot.slane %v22, %v30
  %v32 = vlaneseq
  %v33 = vshrl.u32 %v32, 7
  %v34 = vsub.s32 4, %v33
  %v35 = vrot.slane %v22, %v34
  %v38 = vlaneseq
  %v39 = vshrl.u32 %v38, 7
  %v40 = vsub.s32 0, %v39
  %v41 = vrot.slane %v31, %v40
  %v42 = vlaneseq
  %v43 = vshrl.u32 %v42, 7
  %v44 = vsub.s32 0, %v43
  %v45 = vrot.slane %v35, %v44
  %v49 = vunpack.c.l.b16 %v24
  %v50 = vunpack.c.h.b16 %v24
  %v51 = vunpack.c.l.b16 %v25
  %v52 = vunpack.c.h.b16 %v25
  %v53 = vunpack.c.l.b16 %v26
  %v54 = vunpack.c.h.b16 %v26
  %v55 = vpack.c.b16 %v51, %v49
  %v56 = vpack.c.b16 %v52, %v50
  %v57 = vpack.c.b16 %v53, %v53
  %v58 = vpack.c.b16 %v54, %v54
  %vm61 = vcmask 162816
  %v63 = vsel %vm61, %v23, 0
  %vm65 = vcmask 1041408
  %v67 = vsel %vm65, %v57, 0
  %v70 = vsel %vm65, %v58, 0
  %72 = vmatprep.subr.bf16.mxu0 %v56
  %73 = vmatpush1.bf16.msra.mxu0 %v55
  %74 = vmatprep.subr.bf16.mxu0 %v70
  %75 = vmatpush1.bf16.msra.mxu0 %v67
  %76 = vmatprep.subr.bf16.mxu0 0
  %77 = vmatpush1.bf16.msra.mxu0 0
  %78 = vmatprep.subr.bf16.mxu0 0
  %79 = vmatpush1.bf16.msra.mxu0 0
  %80 = vmatprep.subr.bf16.mxu0 0
  %81 = vmatpush1.bf16.msra.mxu0 0
  %82 = vmatprep.subr.bf16.mxu0 0
  %83 = vmatpush1.bf16.msra.mxu0 0
  %84 = vmatprep.subr.bf16.mxu0 0
  %85 = vmatpush1.bf16.msra.mxu0 0
  %86 = vmatprep.subr.bf16.mxu0 0
  %87 = vmatpush1.bf16.msra.mxu0 0
  %88 = vmatprep.subr.bf16.mxu0 0
  %89 = vmatpush1.bf16.msra.mxu0 0
  %90 = vmatprep.subr.bf16.mxu0 0
  %91 = vmatpush1.bf16.msra.mxu0 0
  %92 = vmatprep.subr.bf16.mxu0 0
  %93 = vmatpush1.bf16.msra.mxu0 0
  %94 = vmatprep.subr.bf16.mxu0 0
  %95 = vmatpush1.bf16.msra.mxu0 0
  %96 = vmatprep.subr.bf16.mxu0 0
  %97 = vmatpush1.bf16.msra.mxu0 0
  %98 = vmatprep.subr.bf16.mxu0 0
  %99 = vmatpush1.bf16.msra.mxu0 0
  %100 = vmatprep.subr.bf16.mxu0 0
  %101 = vmatpush1.bf16.msra.mxu0 0
  %102 = vmatprep.subr.bf16.mxu0 0
  %103 = vmatpush1.bf16.msra.mxu0 0
  %104 = vmatprep.mubr.bf16.mxu0 0
  %105 = vmatmul.mubr.bf16.gmra.mrb[0].mxu0 %v63
  %v106 = vpop.f32.mrb[0].mxu0
  %v107 = vadd.f32 %v41, %v106
  %v108 = vpop.f32.mrb[0].mxu0
  %v109 = vadd.f32 %v45, %v108
  %v110 = vpop.f32.mrb[0].mxu0
  %v111 = vpop.f32.mrb[0].mxu0
  %112 = vdwg.mxu0
  %v113 = vmax.f32 %v107, 0.0
  %v114 = vmax.f32 %v109, 0.0
  %v115 = vpack.c.bf16 %v113, %v113
  %v116 = vpack.c.bf16 %v114, %v114
  %v117 = vld [vmem:[%s2] sm:$0xff]
  %v118 = vld [vmem:[%s2 + $0x8] sm:$0xff]
  %v119 = vld [vmem:[%s2 + $0x10] sm:$0xff]
  %v120 = vld [vmem:[%s2 + $0x18] sm:$0xff]
  %v121 = vld [vmem:[%s2 + $0x20] sm:$0xff]
  %v122 = vld [vmem:[%s2 + $0x28] sm:$0xff]
  %v123 = vld [vmem:[%s2 + $0x30] sm:$0xff]
  %v124 = vld [vmem:[%s2 + $0x38] sm:$0xff]
  %v125 = vld [vmem:[%s2 + $0x40] sm:$0xff]
  %v126 = vld [vmem:[%s2 + $0x48] sm:$0xff]
  %v127 = vld [vmem:[%s2 + $0x50] sm:$0xff]
  %v128 = vld [vmem:[%s2 + $0x58] sm:$0xff]
  %v129 = vld [vmem:[%s2 + $0x60] sm:$0xff]
  %v130 = vld [vmem:[%s2 + $0x68] sm:$0xff]
  %v131 = vld [vmem:[%s2 + $0x70] sm:$0xff]
  %v132 = vld [vmem:[%s2 + $0x78] sm:$0xff]
  %v133 = vld [vmem:[%s2 + $0x80] sm:$0xff]
  %v134 = vld [vmem:[%s2 + $0x88] sm:$0xff]
  %v135 = vld [vmem:[%s2 + $0x90] sm:$0xff]
  %v136 = vld [vmem:[%s2 + $0x98] sm:$0xff]
  %v137 = vld [vmem:[%s2 + $0xa0] sm:$0xff]
  %v138 = vld [vmem:[%s2 + $0xa8] sm:$0xff]
  %v139 = vld [vmem:[%s2 + $0xb0] sm:$0xff]
  %v140 = vld [vmem:[%s2 + $0xb8] sm:$0xff]
  %v141 = vld [vmem:[%s2 + $0xc0] sm:$0xff]
  %v142 = vld [vmem:[%s2 + $0xc8] sm:$0xff]
  %v143 = vld [vmem:[%s2 + $0xd0] sm:$0xff]
  %v144 = vld [vmem:[%s2 + $0xd8] sm:$0xff]
  %v145 = vld [vmem:[%s2 + $0xe0] sm:$0xff]
  %v146 = vld [vmem:[%s2 + $0xe8] sm:$0xff]
  %v147 = vld [vmem:[%s2 + $0xf0] sm:$0xff]
  %v148 = vld [vmem:[%s2 + $0xf8] sm:$0xff]
  %v149 = vlaneseq
  %v150 = vshrl.u32 %v149, 7
  %v151 = vsub.s32 1, %v150
  %v152 = vrot.slane %v22, %v151
  %v153 = vlaneseq
  %v154 = vshrl.u32 %v153, 7
  %v155 = vsub.s32 5, %v154
  %v156 = vrot.slane %v22, %v155
  %v159 = vlaneseq
  %v160 = vshrl.u32 %v159, 7
  %v161 = vsub.s32 1, %v160
  %v162 = vrot.slane %v152, %v161
  %v163 = vlaneseq
  %v164 = vshrl.u32 %v163, 7
  %v165 = vsub.s32 1, %v164
  %v166 = vrot.slane %v156, %v165
  %v199 = vunpack.c.l.b16 %v117
  %v200 = vunpack.c.h.b16 %v117
  %v201 = vunpack.c.l.b16 %v118
  %v202 = vunpack.c.h.b16 %v118
  %v203 = vunpack.c.l.b16 %v119
  %v204 = vunpack.c.h.b16 %v119
  %v205 = vunpack.c.l.b16 %v120
  %v206 = vunpack.c.h.b16 %v120
  %v207 = vunpack.c.l.b16 %v121
  %v208 = vunpack.c.h.b16 %v121
  %v209 = vunpack.c.l.b16 %v122
  %v210 = vunpack.c.h.b16 %v122
  %v211 = vunpack.c.l.b16 %v123
  %v212 = vunpack.c.h.b16 %v123
  %v213 = vunpack.c.l.b16 %v124
  %v214 = vunpack.c.h.b16 %v124
  %v215 = vunpack.c.l.b16 %v125
  %v216 = vunpack.c.h.b16 %v125
  %v217 = vunpack.c.l.b16 %v126
  %v218 = vunpack.c.h.b16 %v126
  %v219 = vunpack.c.l.b16 %v127
  %v220 = vunpack.c.h.b16 %v127
  %v221 = vunpack.c.l.b16 %v128
  %v222 = vunpack.c.h.b16 %v128
  %v223 = vunpack.c.l.b16 %v129
  %v224 = vunpack.c.h.b16 %v129
  %v225 = vunpack.c.l.b16 %v130
  %v226 = vunpack.c.h.b16 %v130
  %v227 = vunpack.c.l.b16 %v131
  %v228 = vunpack.c.h.b16 %v131
  %v229 = vunpack.c.l.b16 %v132
  %v230 = vunpack.c.h.b16 %v132
  %v231 = vunpack.c.l.b16 %v133
  %v232 = vunpack.c.h.b16 %v133
  %v233 = vunpack.c.l.b16 %v134
  %v234 = vunpack.c.h.b16 %v134
  %v235 = vunpack.c.l.b16 %v135
  %v236 = vunpack.c.h.b16 %v135
  %v237 = vunpack.c.l.b16 %v136
  %v238 = vunpack.c.h.b16 %v136
  %v239 = vunpack.c.l.b16 %v137
  %v240 = vunpack.c.h.b16 %v137
  %v241 = vunpack.c.l.b16 %v138
  %v242 = vunpack.c.h.b16 %v138
  %v243 = vunpack.c.l.b16 %v139
  %v244 = vunpack.c.h.b16 %v139
  %v245 = vunpack.c.l.b16 %v140
  %v246 = vunpack.c.h.b16 %v140
  %v247 = vunpack.c.l.b16 %v141
  %v248 = vunpack.c.h.b16 %v141
  %v249 = vunpack.c.l.b16 %v142
  %v250 = vunpack.c.h.b16 %v142
  %v251 = vunpack.c.l.b16 %v143
  %v252 = vunpack.c.h.b16 %v143
  %v253 = vunpack.c.l.b16 %v144
  %v254 = vunpack.c.h.b16 %v144
  %v255 = vunpack.c.l.b16 %v145
  %v256 = vunpack.c.h.b16 %v145
  %v257 = vunpack.c.l.b16 %v146
  %v258 = vunpack.c.h.b16 %v146
  %v259 = vunpack.c.l.b16 %v147
  %v260 = vunpack.c.h.b16 %v147
  %v261 = vunpack.c.l.b16 %v148
  %v262 = vunpack.c.h.b16 %v148
  %v263 = vpack.c.b16 %v201, %v199
  %v264 = vpack.c.b16 %v202, %v200
  %v265 = vpack.c.b16 %v205, %v203
  %v266 = vpack.c.b16 %v206, %v204
  %v267 = vpack.c.b16 %v209, %v207
  %v268 = vpack.c.b16 %v210, %v208
  %v269 = vpack.c.b16 %v213, %v211
  %v270 = vpack.c.b16 %v214, %v212
  %v271 = vpack.c.b16 %v217, %v215
  %v272 = vpack.c.b16 %v218, %v216
  %v273 = vpack.c.b16 %v221, %v219
  %v274 = vpack.c.b16 %v222, %v220
  %v275 = vpack.c.b16 %v225, %v223
  %v276 = vpack.c.b16 %v226, %v224
  %v277 = vpack.c.b16 %v229, %v227
  %v278 = vpack.c.b16 %v230, %v228
  %v279 = vpack.c.b16 %v233, %v231
  %v280 = vpack.c.b16 %v234, %v232
  %v281 = vpack.c.b16 %v237, %v235
  %v282 = vpack.c.b16 %v238, %v236
  %v283 = vpack.c.b16 %v241, %v239
  %v284 = vpack.c.b16 %v242, %v240
  %v285 = vpack.c.b16 %v245, %v243
  %v286 = vpack.c.b16 %v246, %v244
  %v287 = vpack.c.b16 %v249, %v247
  %v288 = vpack.c.b16 %v250, %v248
  %v289 = vpack.c.b16 %v253, %v251
  %v290 = vpack.c.b16 %v254, %v252
  %v291 = vpack.c.b16 %v257, %v255
  %v292 = vpack.c.b16 %v258, %v256
  %v293 = vpack.c.b16 %v261, %v259
  %v294 = vpack.c.b16 %v262, %v260
  %327 = vmatprep.subr.bf16.mxu0 %v264
  %328 = vmatpush1.bf16.msra.mxu0 %v263
  %329 = vmatprep.subr.bf16.mxu0 %v266
  %330 = vmatpush1.bf16.msra.mxu0 %v265
  %331 = vmatprep.subr.bf16.mxu0 %v268
  %332 = vmatpush1.bf16.msra.mxu0 %v267
  %333 = vmatprep.subr.bf16.mxu0 %v270
  %334 = vmatpush1.bf16.msra.mxu0 %v269
  %335 = vmatprep.subr.bf16.mxu0 %v272
  %336 = vmatpush1.bf16.msra.mxu0 %v271
  %337 = vmatprep.subr.bf16.mxu0 %v274
  %338 = vmatpush1.bf16.msra.mxu0 %v273
  %339 = vmatprep.subr.bf16.mxu0 %v276
  %340 = vmatpush1.bf16.msra.mxu0 %v275
  %341 = vmatprep.subr.bf16.mxu0 %v278
  %342 = vmatpush1.bf16.msra.mxu0 %v277
  %343 = vmatprep.subr.bf16.mxu0 %v280
  %344 = vmatpush1.bf16.msra.mxu0 %v279
  %345 = vmatprep.subr.bf16.mxu0 %v282
  %346 = vmatpush1.bf16.msra.mxu0 %v281
  %347 = vmatprep.subr.bf16.mxu0 %v284
  %348 = vmatpush1.bf16.msra.mxu0 %v283
  %349 = vmatprep.subr.bf16.mxu0 %v286
  %350 = vmatpush1.bf16.msra.mxu0 %v285
  %351 = vmatprep.subr.bf16.mxu0 %v288
  %352 = vmatpush1.bf16.msra.mxu0 %v287
  %353 = vmatprep.subr.bf16.mxu0 %v290
  %354 = vmatpush1.bf16.msra.mxu0 %v289
  %355 = vmatprep.subr.bf16.mxu0 %v292
  %356 = vmatpush1.bf16.msra.mxu0 %v291
  %357 = vmatprep.subr.bf16.mxu0 %v294
  %358 = vmatpush1.bf16.msra.mxu0 %v293
  %359 = vmatprep.mubr.bf16.mxu0 %v116
  %360 = vmatmul.mubr.bf16.gmra.mrb[0].mxu0 %v115
  %v361 = vpop.f32.mrb[0].mxu0
  %v362 = vadd.f32 %v162, %v361
  %v363 = vpop.f32.mrb[0].mxu0
  %v364 = vadd.f32 %v166, %v363
  %v365 = vpop.f32.mrb[0].mxu0
  %v366 = vpop.f32.mrb[0].mxu0
  %367 = vdwg.mxu0
  %v368 = vmax.f32 %v362, 0.0
  %v369 = vmax.f32 %v364, 0.0
  %v370 = vlaneseq
  %v371 = vshrl.u32 %v370, 7
  %v372 = vsub.s32 2, %v371
  %v373 = vrot.slane %v22, %v372
  %v374 = vlaneseq
  %v375 = vshrl.u32 %v374, 7
  %v376 = vsub.s32 6, %v375
  %v377 = vrot.slane %v22, %v376
  %v380 = vlaneseq
  %v381 = vshrl.u32 %v380, 7
  %v382 = vsub.s32 2, %v381
  %v383 = vrot.slane %v373, %v382
  %v384 = vlaneseq
  %v385 = vshrl.u32 %v384, 7
  %v386 = vsub.s32 2, %v385
  %v387 = vrot.slane %v377, %v386
  %v388 = vmul.f32 %v368, %v383
  %v389 = vmul.f32 %v369, %v387
  %v390 = vadd.f32 %v388, %v389
  %391 = vadd.xlane.f32.xlu0 %v390
  %v392 = vpop.xlane.xlu0 %391
  %s393 = sld [smem:[#allocation2]]
  %v394 = vstv %s393
  %v395 = vadd.f32 %v392, %v394
  %vm396 = vcmask 7168
  %397 = vst.msk [vmem:[%s5] sm:$0xff] %vm396, %v395
  // Predicated region
  $region22: #{qnetwork_forward.1} parent=0 // pred_check
    _
  $region23: #{qnetwork_forward.1} parent=0 // pred_check_branch
    %399 = sbr.rel (0) target = $region25
  $region24: #{qnetwork_forward.1} parent=0 // pred_region
    _
  $region25: #{qnetwork_forward.1} parent=0 // pred_fallthru
    _
  // Predicated region
  $region26: #{qnetwork_forward.1} parent=0 // pred_check
    _
  $region27: #{qnetwork_forward.1} parent=0 // pred_check_branch
    %401 = sbr.rel (0) target = $region29
  $region28: #{qnetwork_forward.1} parent=0 // pred_region
    _
  $region29: #{qnetwork_forward.1} parent=0 // pred_fallthru
    _

</llo_original>
